<compile_context>
chip_gen: v7x
topology: tpu7x:2x2x1
jax: 0.10.0
libtpu: 0.0.40
codegen_flags: <defaults>
</compile_context>

<pallas_src>
import functools

import jax
import jax.numpy as jnp
from jax.experimental import pallas as pl
from jax.experimental.pallas import tpu as pltpu


def _mean_pool_kernel(x_ref, o_ref, acc_ref, *, l_total, tl, mask_tail):
    """x_ref: (tr, tl) block; o_ref: (tr, 1); acc_ref: (tr, 1) f32 scratch."""
    k = pl.program_id(1)           # reduction (L) axis, last in the grid
    nk = pl.num_programs(1)

    @pl.when(k == 0)
    def _init():
        acc_ref[...] = jnp.zeros_like(acc_ref)

    x = x_ref[...]  # (tr, tl), input dtype

    if mask_tail:
        # Interior blocks: unmasked accumulate (no iota/compare/select work).
        @pl.when(k < nk - 1)
        def _interior():
            acc_ref[...] += jnp.sum(x, axis=-1, keepdims=True, dtype=jnp.float32)

        # Last (partial) block: mask out-of-range lanes before accumulating.
        @pl.when(k == nk - 1)
        def _tail():
            lane = jax.lax.broadcasted_iota(jnp.int32, x.shape, dimension=1)
            valid = (k * tl + lane) < l_total
            xm = jnp.where(valid, x, jnp.zeros_like(x))
            acc_ref[...] += jnp.sum(xm, axis=-1, keepdims=True, dtype=jnp.float32)
    else:
        acc_ref[...] += jnp.sum(x, axis=-1, keepdims=True, dtype=jnp.float32)

    @pl.when(k == nk - 1)
    def _finalize():
        o_ref[...] = (acc_ref[...] * (1.0 / l_total)).astype(o_ref.dtype)


def _choose_tiles(r, l, itemsize, target_block_bytes):
    """Pick (tr, tl) for the flattened (R, L) layout."""
    row_align = max(8, 32 // itemsize)          # 8 rows f32, 16 bf16, 32 int8
    lane_floor = max(128, 2048 // itemsize)     # >= 2 KiB contiguous per DMA row
    budget_elems = max(1, target_block_bytes // itemsize)

    # tl: take the full L whenever at least `row_align` full rows fit the
    # budget (no tail masking, fully contiguous DMA rows); otherwise tile L in
    # multiples of 128 lanes with the 2 KiB-per-row floor.
    if row_align * l <= budget_elems:
        tl = l
    else:
        tl = (budget_elems // row_align) // 128 * 128
        tl = max(lane_floor, tl)
        if tl >= l:
            tl = l

    # tr: as many rows as fit the budget, in units of row_align.  Per-row cost
    # includes the lane-padded output block and f32 accumulator rows so that a
    # tiny-L / huge-R input cannot blow up the (tr, 1)->(tr, 128) padding.
    per_row_bytes = tl * itemsize + 128 * itemsize + 256
    tr = max(row_align, (target_block_bytes // per_row_bytes) // row_align * row_align)

    # v7x has 2 TensorCores and only the R axis is "parallel": keep >= 2 R
    # tiles whenever there is enough work to split.  Free on v5e/v6e (1 TC).
    # TODO(synk): if R < 2*row_align but L is huge, L could be split across the
    # two cores with per-core partial sums + a tiny combine; not done here.
    if r >= 2 * row_align:
        half = -(-r // 2)                              # ceil(r / 2)
        half = -(-half // row_align) * row_align       # round up to row_align
        tr = min(tr, half)

    if tr >= r:
        tr = r                                         # full dim is always legal
    return tr, tl


def _adaptive_avg_pool1d_flat(x2d, *, target_block_bytes):
    """x2d: (R, L) -> (R, 1) mean over L via a tiled Pallas kernel."""
    r, l = x2d.shape
    itemsize = jnp.dtype(x2d.dtype).itemsize
    tr, tl = _choose_tiles(r, l, itemsize, target_block_bytes)
    grid = (pl.cdiv(r, tr), pl.cdiv(l, tl))
    mask_tail = (l % tl) != 0

    kernel = functools.partial(
        _mean_pool_kernel, l_total=l, tl=tl, mask_tail=mask_tail
    )

    # Explicit scoped-VMEM limit derived from the actual footprint:
    #   2x double-buffered input block + 2x lane-padded output block + acc.
    in_bytes = tr * tl * itemsize
    out_bytes = tr * 128 * itemsize
    acc_bytes = tr * 128 * 4
    footprint = 2 * (in_bytes + out_bytes) + acc_bytes
    vmem_limit = int(min(max(footprint + (4 << 20), 16 << 20), 48 << 20))

    cost = pl.CostEstimate(
        flops=r * l,
        transcendentals=0,
        bytes_accessed=r * l * itemsize + r * itemsize,
    )

    return pl.pallas_call(
        kernel,
        out_shape=jax.ShapeDtypeStruct((r, 1), x2d.dtype),
        grid=grid,
        in_specs=[pl.BlockSpec((tr, tl), lambda i, k: (i, k))],
        out_specs=pl.BlockSpec((tr, 1), lambda i, k: (i, 0)),
        scratch_shapes=[pltpu.VMEM((tr, 1), jnp.float32)],
        compiler_params=pltpu.CompilerParams(
            dimension_semantics=("parallel", "arbitrary"),
            vmem_limit_bytes=vmem_limit,
        ),
        cost_estimate=cost,
    )(x2d)


def adaptive_concat_pool1d(x, *, target_block_bytes=8 * 1024 * 1024):
    """x: (N, C, L) -> (N, 2*C, 1), matching AdaptiveConcatPool1d.forward."""
    n, c, l = x.shape
    mean = _adaptive_avg_pool1d_flat(
        x.reshape(n * c, l), target_block_bytes=target_block_bytes
    )                                   # (N*C, 1)
    mean = mean.reshape(n, c)           # free metadata reshape
    # Both module branches are AdaptiveAvgPool1d(1) in this model: duplicate
    # channels and add the trailing singleton dim in the wrapper.
    return jnp.concatenate([mean, mean], axis=1)[:, :, None]


def _reference(x):
    m = jnp.mean(x, axis=-1, keepdims=True)
    return jnp.concatenate([m, m], axis=1)


if __name__ == "__main__":
    key = jax.random.PRNGKey(0)

    # Small canonical shape for the module: (N, C, L) = (batch=2, channels=4, L=16).
    N, C, L = 2, 4, 16
    x = jax.random.normal(key, (N, C, L), dtype=jnp.float32)
    out = jax.block_until_ready(adaptive_concat_pool1d(x))
    ref = _reference(x)
    assert out.shape == (N, 2 * C, 1), out.shape
    assert jnp.allclose(out, ref, atol=1e-5, rtol=1e-5), "mismatch vs reference"

    # Second check exercising the tiled paths (multiple R tiles, multiple L
    # tiles, tail mask on the last L step) by forcing tiny blocks.
    key2 = jax.random.PRNGKey(1)
    N2, C2, L2 = 2, 8, 1000
    x2 = jax.random.normal(key2, (N2, C2, L2), dtype=jnp.float32)
    out2 = jax.block_until_ready(
        adaptive_concat_pool1d(x2, target_block_bytes=4096)
    )
    ref2 = _reference(x2)
    assert out2.shape == (N2, 2 * C2, 1), out2.shape
    assert jnp.allclose(out2, ref2, atol=1e-5, rtol=1e-4), "mismatch (tiled path)"

    print("KERNEL_OK")
</pallas_src>

<mosaic_0001>
module attributes {stable_mosaic.version = 11 : i64} {
  func.func @_mean_pool_kernel(%arg0: i32, %arg1: i32, %arg2: memref<8x16xf32, #tpu.memory_space<vmem>>, %arg3: memref<8x1xf32, #tpu.memory_space<vmem>>, %arg4: memref<8x1xf32, #tpu.memory_space<vmem>>) attributes {dimension_semantics = [#tpu.dimension_semantics<parallel>, #tpu.dimension_semantics<arbitrary>], iteration_bounds = array<i64: 1, 1>, scalar_prefetch = 0 : i64, scratch_operands = 1 : i64, tpu.core_type = #tpu.core_type<tc>, window_params = [{transform_indices = @transform_0, window_bounds = array<i64: 8, 16>}, {transform_indices = @transform_1, window_bounds = array<i64: 8, 1>}]} {
    %c0_i32 = arith.constant 0 : i32
    %0 = arith.cmpi eq, %arg1, %c0_i32 : i32
    %1 = arith.extui %0 : i1 to i32
    %c0_i32_0 = arith.constant 0 : i32
    %2 = arith.cmpi ne, %1, %c0_i32_0 : i32
    scf.if %2 {
      %cst_8 = arith.constant 0.000000e+00 : f32
      %12 = vector.broadcast %cst_8 : f32 to vector<8x1xf32>
      %c0_9 = arith.constant 0 : index
      %c0_10 = arith.constant 0 : index
      %13 = vector.load %arg4[%c0_9, %c0_10] : memref<8x1xf32, #tpu.memory_space<vmem>>, vector<8x1xf32>
      tpu.vector_store %arg4[%c0_9, %c0_10], %12 {strides = array<i32>} : memref<8x1xf32, #tpu.memory_space<vmem>>, vector<8x1xf32>,
    } else {
    }
    %c0 = arith.constant 0 : index
    %c0_1 = arith.constant 0 : index
    %3 = vector.load %arg2[%c0, %c0_1] : memref<8x16xf32, #tpu.memory_space<vmem>>, vector<8x16xf32>
    %c0_2 = arith.constant 0 : index
    %c0_3 = arith.constant 0 : index
    %4 = vector.load %arg4[%c0_2, %c0_3] : memref<8x1xf32, #tpu.memory_space<vmem>>, vector<8x1xf32>
    %cst = arith.constant dense<0.000000e+00> : vector<8xf32>
    %5 = vector.multi_reduction <add>, %3, %cst [1] : vector<8x16xf32> to vector<8xf32>
    %6 = vector.shape_cast %5 : vector<8xf32> to vector<8x1xf32>
    %7 = arith.addf %4, %6 : vector<8x1xf32>
    %c0_4 = arith.constant 0 : index
    %c0_5 = arith.constant 0 : index
    %8 = vector.load %arg4[%c0_4, %c0_5] : memref<8x1xf32, #tpu.memory_space<vmem>>, vector<8x1xf32>
    tpu.vector_store %arg4[%c0_4, %c0_5], %7 {strides = array<i32>} : memref<8x1xf32, #tpu.memory_space<vmem>>, vector<8x1xf32>,
    %c0_i32_6 = arith.constant 0 : i32
    %9 = arith.cmpi eq, %arg1, %c0_i32_6 : i32
    %10 = arith.extui %9 : i1 to i32
    %c0_i32_7 = arith.constant 0 : i32
    %11 = arith.cmpi ne, %10, %c0_i32_7 : i32
    scf.if %11 {
      %c0_8 = arith.constant 0 : index
      %c0_9 = arith.constant 0 : index
      %12 = vector.load %arg4[%c0_8, %c0_9] : memref<8x1xf32, #tpu.memory_space<vmem>>, vector<8x1xf32>
      %cst_10 = arith.constant 6.250000e-02 : f32
      %13 = vector.broadcast %cst_10 : f32 to vector<8x1xf32>
      %14 = arith.mulf %12, %13 : vector<8x1xf32>
      %c0_11 = arith.constant 0 : index
      %c0_12 = arith.constant 0 : index
      %15 = vector.load %arg3[%c0_11, %c0_12] : memref<8x1xf32, #tpu.memory_space<vmem>>, vector<8x1xf32>
      tpu.vector_store %arg3[%c0_11, %c0_12], %14 {strides = array<i32>} : memref<8x1xf32, #tpu.memory_space<vmem>>, vector<8x1xf32>,
    } else {
    }
    return
  }
  func.func @transform_0(%arg0: i32, %arg1: i32) -> (i32, i32) {
    %c0_i32 = arith.constant 0 : i32
    return %arg0, %arg1 : i32, i32
  }
  func.func @transform_1(%arg0: i32, %arg1: i32) -> (i32, i32) {
    %c0_i32 = arith.constant 0 : i32
    %c0_i32_0 = arith.constant 0 : i32
    return %arg0, %c0_i32 : i32, i32
  }
}

</mosaic_0001>

<llo_original>
// kernel: tpu_custom_call.1
$region0: #{tpu_custom_call.1}
  #allocation0 [shape = 'u32[]', space=smem, size = 0x4, offset = 0x4, fixed_abs, tag = 'smem constant byte address 0x4 - core index']
  #allocation1 [shape = 'u32[144,128]{1,0:T(1,128)}', space=vmem, size = 0x12000, scoped, tag = 'internal scratch']
  #allocation2 [shape = 'f32[8,1]{1,0:T(8,128)}', space=vmem, size = 0x1000, scoped, tag = 'scratch operand']
  %s0 = inlined_call_operand.hbm [shape: f32[8,16], index: 0, kind: input, shape index: {}]
  %s1 = inlined_call_operand.vmem [shape: f32[8,1], index: 1, kind: output, shape index: {}]
  %s2 = sld [smem:[#allocation0]]
  $region26: #{tpu_custom_call.1} parent=0
    _
  %s4 = ssub.s32 1, %s2
  %s5 = scalar_select 0, %s4, %s2
  $region1: #{tpu_custom_call.1} parent=0
    #allocation3 [shape = 'u8[4096]{0}', space=vmem, size = 0x1000, scoped, tag = 'input window, operand 0, single buffered']
    #allocation4 [shape = 's32[1]{0}', space=sflag, size = 0x4, scoped, tag = 'scoped memory for tpu_custom_call.1']
    %6 = vsyncpa [#allocation4], 0
    // Predicated region
    $region2: #{tpu_custom_call.1} parent=1 // pred_check
      _
    $region3: #{tpu_custom_call.1} parent=1 // pred_check_branch
      %8 = sbr.rel (0) target = $region5
    $region4: #{tpu_custom_call.1} parent=1 // pred_region
      %s10 = ssub.s32 128, 128
      %11 = vsyncadd [#allocation4], %s10
      %s13 = sshll.u32 [#allocation3], 4
      %s14 = int_to_ptr.vmem [resolvable:$true] %s13
      %16 = dma.hbm_to_vmem [thread:$0]  %s0, 128, %s14, [#allocation4]
    $region5: #{tpu_custom_call.1} parent=1 // pred_fallthru
      _
    // Predicated region
    $region6: #{tpu_custom_call.1} parent=1 // pred_check
      _
    $region7: #{tpu_custom_call.1} parent=1 // pred_check_branch
      %18 = sbr.rel (0) target = $region9
    $region8: #{tpu_custom_call.1} parent=1 // pred_region
      %19 = dma.done [#allocation4], 128
    $region9: #{tpu_custom_call.1} parent=1 // pred_fallthru
      _
    %p20 = scmp.eq.s32.totalorder 0, 0
    // Predicated region
    $region10: #{tpu_custom_call.1} parent=1 // pred_check
      %p21 = pneg %p20
    $region11: #{tpu_custom_call.1} parent=1 // pred_check_branch
      %23 = sbr.rel (%p21) target = $region13
    $region12: #{tpu_custom_call.1} parent=1 // pred_region
      %vm24 = vcmask 7168
      %25 = vst.msk [vmem:[#allocation2] sm:$0xff] %vm24, 0.0
    $region13: #{tpu_custom_call.1} parent=1 // pred_fallthru
      _
    %v26 = vld [vmem:[#allocation3] sm:$0xff]
    %v27 = vld [vmem:[#allocation2] sm:$0xff]
    %vm28 = vcmask 130048
    %v29 = vsel %vm28, %v26, 0.0
    %30 = vadd.xlane.f32.xlu0 %v29
    %v31 = vpop.xlane.xlu0 %30
    %v32 = vadd.f32 %v27, %v31
    %vm33 = vcmask 7168
    %34 = vst.msk [vmem:[#allocation2] sm:$0xff] %vm33, %v32
    // Predicated region
    $region14: #{tpu_custom_call.1} parent=1 // pred_check
      %p35 = pneg %p20
    $region15: #{tpu_custom_call.1} parent=1 // pred_check_branch
      %37 = sbr.rel (%p35) target = $region17
    $region16: #{tpu_custom_call.1} parent=1 // pred_region
      %v38 = vld [vmem:[#allocation2] sm:$0xff]
      %v39 = vmul.f32 %v38, 0.0625
      %40 = vst.msk [vmem:[%s1] sm:$0xff] %vm33, %v39
    $region17: #{tpu_custom_call.1} parent=1 // pred_fallthru
      _
    // Predicated region
    $region18: #{tpu_custom_call.1} parent=1 // pred_check
      _
    $region19: #{tpu_custom_call.1} parent=1 // pred_check_branch
      %42 = sbr.rel (0) target = $region21
    $region20: #{tpu_custom_call.1} parent=1 // pred_region
      _
    $region21: #{tpu_custom_call.1} parent=1 // pred_fallthru
      _
    // Predicated region
    $region22: #{tpu_custom_call.1} parent=1 // pred_check
      _
    $region23: #{tpu_custom_call.1} parent=1 // pred_check_branch
      %44 = sbr.rel (0) target = $region25
    $region24: #{tpu_custom_call.1} parent=1 // pred_region
      _
    $region25: #{tpu_custom_call.1} parent=1 // pred_fallthru
      _
    %45 = vsyncpa [#allocation4], 1

</llo_original>
